<compile_context>
chip_gen: v7x
topology: tpu7x:2x2x1
jax: 0.10.0
libtpu: 0.0.40
codegen_flags: <defaults>
</compile_context>

<pallas_src>
import jax
import jax.numpy as jnp
import numpy as np
from jax.experimental import pallas as pl
from jax.experimental.pallas import tpu as pltpu


_NEG_BIG = -1e30  # bias value for padded class columns; exp underflows to 0


def _round_up(x, m):
    return ((x + m - 1) // m) * m


def _make_cam_kernel(hw, t_hw, chunk, need_mask):
    """Builds the CAM kernel closure for static (HW, t_hw, chunk, mask) config."""
    n_chunks = t_hw // chunk

    def kernel(x_ref, w_ref, b_ref, o_ref, acc_ref):
        # x_ref: [tn, C, t_hw] streamed chunk of the feature map (native dtype)
        # w_ref: [C, K_pad]    weights with 1/HW folded in (VMEM-resident)
        # b_ref: [1, K_pad]    bias (padded classes = large negative)
        # o_ref: [tn, K_pad]   output block (resident across the HW axis)
        # acc_ref: [tn, C, chunk] f32 partial-sum accumulator (VPU adds only)
        h = pl.program_id(1)
        last_h = pl.num_programs(1) - 1

        @pl.when(h == 0)
        def _init():
            acc_ref[...] = jnp.zeros_like(acc_ref)

        def accumulate(apply_mask):
            # Pure elementwise (VPU) accumulation over 128-lane chunks; no
            # cross-lane reduce in the hot loop.
            for j in range(n_chunks):
                c = x_ref[:, :, j * chunk:(j + 1) * chunk].astype(jnp.float32)
                if apply_mask:
                    lane = jax.lax.broadcasted_iota(jnp.int32, c.shape, 2)
                    pos = h * t_hw + j * chunk + lane
                    c = jnp.where(pos < hw, c, 0.0)
                acc_ref[...] += c

        if need_mask:
            # Only the last HW block can read past the true extent; keep the
            # fast (unmasked) path for all interior blocks.
            pl.when(h != last_h)(lambda: accumulate(False))
            pl.when(h == last_h)(lambda: accumulate(True))
        else:
            accumulate(False)

        @pl.when(h == last_h)
        def _finalize():
            # Single cross-lane reduce (XLU) per N-tile, then matmul + softmax.
            gap = jnp.sum(acc_ref[...], axis=-1)          # [tn, C] spatial sum
            logits = jnp.dot(gap, w_ref[...], preferred_element_type=jnp.float32)
            logits = logits + b_ref[...]                   # broadcast [1, K_pad]
            m = jnp.max(logits, axis=-1, keepdims=True)
            e = jnp.exp(logits - m)
            denom = jnp.sum(e, axis=-1, keepdims=True)
            o_ref[...] = (e * pl.reciprocal(denom, approx=False)).astype(o_ref.dtype)

    return kernel


def cam_forward(x_nchw, weight_kc, bias_k, *, tn=None, t_hw=None):
    """CAM forward: softmax(Linear(GAP(x))).

    x_nchw: [N, C, H, W] (f32 or bf16); weight_kc: [K, C] (PyTorch layout);
    bias_k: [K]. Returns [N, K] float32 class probabilities.
    """
    N, C, H, W = x_nchw.shape
    K = weight_kc.shape[0]
    HW = H * W
    itemsize = jnp.dtype(x_nchw.dtype).itemsize

    # Lane-dense class dimension (unmasked vst on the output).
    K_pad = _round_up(max(K, 128), 128)

    # Batch tile: must be a multiple of 8 or equal to N (output block sublane
    # rule).  N > 8 -> tn = 8, so there are >= 2 N tiles and the "parallel"
    # axis can split across v7x's two TensorCores.
    if tn is None:
        tn = 8 if N > 8 else N

    # Spatial tile: multiple of 128 lanes (or the full HW when HW < 128), sized
    # so one streamed x buffer is <= ~8 MiB.  The ragged tail is masked
    # in-kernel; no wrapper-side padding of x.
    if HW < 128:
        chunk = HW
        t_hw = HW
    else:
        chunk = 128
        if t_hw is None:
            budget = 8 * 1024 * 1024  # per x stream buffer
            max_t_hw = max(128, (budget // max(1, tn * C * itemsize)) // 128 * 128)
            t_hw = min(max_t_hw, (HW // 128) * 128)
        else:
            t_hw = max(128, min((HW // 128) * 128, (t_hw // 128) * 128))
    need_mask = (HW % t_hw) != 0
    # TODO(synk): for extreme channel counts (tn*C*128*itemsize far above the
    # budget) the stream cannot shrink below the 128-lane floor without tiling
    # C; the VMEM limit below is simply raised to cover it in that corner case.

    grid = (pl.cdiv(N, tn), pl.cdiv(HW, t_hw))

    # Merge the spatial dims; this is a free (view-style) reshape, no HBM copy.
    x3 = x_nchw.reshape(N, C, HW)

    # Fold the 1/HW mean scale into the weights; pad classes to K_pad.
    w = jnp.transpose(weight_kc).astype(jnp.float32) * (1.0 / HW)    # [C, K]
    w = jnp.pad(w, ((0, 0), (0, K_pad - K)))                         # [C, K_pad]
    b = jnp.pad(bias_k.astype(jnp.float32), (0, K_pad - K),
                constant_values=_NEG_BIG).reshape(1, K_pad)

    kernel = _make_cam_kernel(HW, t_hw, chunk, need_mask)

    def build(single_buffer_params):
        wb_kwargs = (dict(pipeline_mode=pl.Buffered(buffer_count=1))
                     if single_buffer_params else {})
        wb_factor = 1 if single_buffer_params else 2
        # Exact VMEM need: double-buffered x stream + weights/bias + output + acc.
        need = (2 * tn * C * t_hw * itemsize
                + wb_factor * (C + 1) * K_pad * 4
                + 2 * tn * K_pad * 4
                + tn * C * chunk * 4)
        vmem_limit = max(16 * 1024 * 1024, need + 4 * 1024 * 1024)
        vmem_limit = min(vmem_limit, max(48 * 1024 * 1024, need + 2 * 1024 * 1024))
        return pl.pallas_call(
            kernel,
            out_shape=jax.ShapeDtypeStruct((N, K_pad), jnp.float32),
            grid_spec=pltpu.PrefetchScalarGridSpec(
                num_scalar_prefetch=0,
                grid=grid,
                in_specs=[
                    # x chunks stream over (N tile, HW tile).
                    pl.BlockSpec((tn, C, t_hw), lambda n, h: (n, 0, h)),
                    # Weights / bias fetched once, VMEM-resident for all steps.
                    pl.BlockSpec((C, K_pad), lambda n, h: (0, 0), **wb_kwargs),
                    pl.BlockSpec((1, K_pad), lambda n, h: (0, 0), **wb_kwargs),
                ],
                out_specs=pl.BlockSpec((tn, K_pad), lambda n, h: (n, 0)),
                scratch_shapes=[pltpu.VMEM((tn, C, chunk), jnp.float32)],
            ),
            compiler_params=pltpu.CompilerParams(
                dimension_semantics=("parallel", "arbitrary"),
                vmem_limit_bytes=int(vmem_limit),
            ),
        )

    # Only bother single-buffering w/b when they are big enough to matter.
    attempt_single = (C * K_pad * 4) >= (1 << 20)
    if attempt_single:
        try:
            out = jax.block_until_ready(build(True)(x3, w, b))
        except Exception:
            # pipeline_mode=pl.Buffered(1) not supported by this build; use the
            # default double-buffered resident specs (correct, slightly more VMEM).
            out = build(False)(x3, w, b)
    else:
        out = build(False)(x3, w, b)

    return out[:, :K]


def cam_reference(x_nchw, weight_kc, bias_k):
    gap = jnp.mean(x_nchw.astype(jnp.float32), axis=(2, 3))          # [N, C]
    logits = gap @ weight_kc.T.astype(jnp.float32) + bias_k
    return jax.nn.softmax(logits, axis=1)


if __name__ == "__main__":
    base_key = jax.random.PRNGKey(0)

    def run_case(case_id, N, C, H, W, K, t_hw):
        kx, kw, kb = jax.random.split(jax.random.fold_in(base_key, case_id), 3)
        x = jax.random.normal(kx, (N, C, H, W), dtype=jnp.float32)
        # PyTorch nn.Linear default init: U(-1/sqrt(C), 1/sqrt(C)).
        bound = 1.0 / np.sqrt(C)
        weight = jax.random.uniform(kw, (K, C), minval=-bound, maxval=bound,
                                    dtype=jnp.float32)
        bias = jax.random.uniform(kb, (K,), minval=-bound, maxval=bound,
                                  dtype=jnp.float32)
        out = jax.block_until_ready(cam_forward(x, weight, bias, t_hw=t_hw))
        ref = cam_reference(x, weight, bias)
        np.testing.assert_allclose(np.asarray(out), np.asarray(ref),
                                   rtol=1e-5, atol=1e-5)

    # Case 0: small shapes consistent with the module; t_hw=128 exercises the
    # multi-step HW accumulation path (HW=256 -> 2 grid steps, no masking).
    run_case(0, N=2, C=4, H=16, W=16, K=10, t_hw=128)
    # Case 1: 13x13 feature map (HW=169, not a multiple of 128) exercises the
    # in-kernel tail masking that replaced the wrapper-side jnp.pad.
    run_case(1, N=3, C=6, H=13, W=13, K=10, t_hw=128)

    print("KERNEL_OK")
</pallas_src>

<mosaic_0001>
module attributes {stable_mosaic.version = 11 : i64} {
  func.func @kernel(%arg0: i32, %arg1: i32, %arg2: memref<2x4x128xf32, #tpu.memory_space<vmem>>, %arg3: memref<4x128xf32, #tpu.memory_space<vmem>>, %arg4: memref<1x128xf32, #tpu.memory_space<vmem>>, %arg5: memref<2x128xf32, #tpu.memory_space<vmem>>, %arg6: memref<2x4x128xf32, #tpu.memory_space<vmem>>) attributes {dimension_semantics = [#tpu.dimension_semantics<parallel>, #tpu.dimension_semantics<arbitrary>], iteration_bounds = array<i64: 1, 2>, scalar_prefetch = 0 : i64, scratch_operands = 1 : i64, tpu.core_type = #tpu.core_type<tc>, window_params = [{transform_indices = @transform_0, window_bounds = array<i64: 2, 4, 128>}, {pipeline_mode = #tpu.pipeline_mode<synchronous>, transform_indices = @transform_1, window_bounds = array<i64: 4, 128>}, {pipeline_mode = #tpu.pipeline_mode<synchronous>, transform_indices = @transform_2, window_bounds = array<i64: 1, 128>}, {transform_indices = @transform_3, window_bounds = array<i64: 2, 128>}]} {
    %c0_i32 = arith.constant 0 : i32
    %0 = arith.cmpi eq, %arg1, %c0_i32 : i32
    %1 = arith.extui %0 : i1 to i32
    %c0_i32_0 = arith.constant 0 : i32
    %2 = arith.cmpi ne, %1, %c0_i32_0 : i32
    scf.if %2 {
      %cst = arith.constant 0.000000e+00 : f32
      %10 = vector.broadcast %cst : f32 to vector<2x4x128xf32>
      %c0_10 = arith.constant 0 : index
      %c0_11 = arith.constant 0 : index
      %c0_12 = arith.constant 0 : index
      %11 = vector.load %arg6[%c0_10, %c0_11, %c0_12] : memref<2x4x128xf32, #tpu.memory_space<vmem>>, vector<2x4x128xf32>
      tpu.vector_store %arg6[%c0_10, %c0_11, %c0_12], %10 {strides = array<i32>} : memref<2x4x128xf32, #tpu.memory_space<vmem>>, vector<2x4x128xf32>,
    } else {
    }
    %c0 = arith.constant 0 : index
    %c0_1 = arith.constant 0 : index
    %c0_2 = arith.constant 0 : index
    %3 = vector.load %arg2[%c0, %c0_1, %c0_2] : memref<2x4x128xf32, #tpu.memory_space<vmem>>, vector<2x4x128xf32>
    %c0_3 = arith.constant 0 : index
    %c0_4 = arith.constant 0 : index
    %c0_5 = arith.constant 0 : index
    %4 = vector.load %arg6[%c0_3, %c0_4, %c0_5] : memref<2x4x128xf32, #tpu.memory_space<vmem>>, vector<2x4x128xf32>
    %5 = arith.addf %4, %3 : vector<2x4x128xf32>
    %c0_6 = arith.constant 0 : index
    %c0_7 = arith.constant 0 : index
    %c0_8 = arith.constant 0 : index
    %6 = vector.load %arg6[%c0_6, %c0_7, %c0_8] : memref<2x4x128xf32, #tpu.memory_space<vmem>>, vector<2x4x128xf32>
    tpu.vector_store %arg6[%c0_6, %c0_7, %c0_8], %5 {strides = array<i32>} : memref<2x4x128xf32, #tpu.memory_space<vmem>>, vector<2x4x128xf32>,
    %c1_i32 = arith.constant 1 : i32
    %7 = arith.cmpi eq, %arg1, %c1_i32 : i32
    %8 = arith.extui %7 : i1 to i32
    %c0_i32_9 = arith.constant 0 : i32
    %9 = arith.cmpi ne, %8, %c0_i32_9 : i32
    scf.if %9 {
      %c0_10 = arith.constant 0 : index
      %c0_11 = arith.constant 0 : index
      %c0_12 = arith.constant 0 : index
      %10 = vector.load %arg6[%c0_10, %c0_11, %c0_12] : memref<2x4x128xf32, #tpu.memory_space<vmem>>, vector<2x4x128xf32>
      %cst = arith.constant dense<0.000000e+00> : vector<2x4xf32>
      %11 = vector.multi_reduction <add>, %10, %cst [2] : vector<2x4x128xf32> to vector<2x4xf32>
      %c0_13 = arith.constant 0 : index
      %c0_14 = arith.constant 0 : index
      %12 = vector.load %arg3[%c0_13, %c0_14] : memref<4x128xf32, #tpu.memory_space<vmem>>, vector<4x128xf32>
      %cst_15 = arith.constant dense<0.000000e+00> : vector<2x128xf32>
      %13 = tpu.matmul %11, %12, %cst_15 {dimension_numbers = #tpu.dot_dimension_numbers<[1], [0], [0], [1], [0, 0, 1, 1], [], []>} : vector<2x4xf32>, vector<4x128xf32>, vector<2x128xf32> -> vector<2x128xf32>
      %c0_16 = arith.constant 0 : index
      %c0_17 = arith.constant 0 : index
      %14 = vector.load %arg4[%c0_16, %c0_17] : memref<1x128xf32, #tpu.memory_space<vmem>>, vector<1x128xf32>
      %15 = vector.broadcast %14 : vector<1x128xf32> to vector<2x128xf32>
      %16 = arith.addf %13, %15 : vector<2x128xf32>
      %cst_18 = arith.constant dense<0xFF800000> : vector<2xf32>
      %17 = vector.multi_reduction <maximumf>, %16, %cst_18 [1] : vector<2x128xf32> to vector<2xf32>
      %18 = vector.shape_cast %17 : vector<2xf32> to vector<2x1xf32>
      %19 = vector.broadcast %18 : vector<2x1xf32> to vector<2x128xf32>
      %20 = arith.subf %16, %19 : vector<2x128xf32>
      %21 = math.exp %20 : vector<2x128xf32>
      %cst_19 = arith.constant dense<0.000000e+00> : vector<2xf32>
      %22 = vector.multi_reduction <add>, %21, %cst_19 [1] : vector<2x128xf32> to vector<2xf32>
      %23 = vector.shape_cast %22 : vector<2xf32> to vector<2x1xf32>
      %24 = tpu.reciprocal %23 : vector<2x1xf32> -> vector<2x1xf32>
      %25 = vector.broadcast %24 : vector<2x1xf32> to vector<2x128xf32>
      %26 = arith.mulf %21, %25 : vector<2x128xf32>
      %c0_20 = arith.constant 0 : index
      %c0_21 = arith.constant 0 : index
      %27 = vector.load %arg5[%c0_20, %c0_21] : memref<2x128xf32, #tpu.memory_space<vmem>>, vector<2x128xf32>
      tpu.vector_store %arg5[%c0_20, %c0_21], %26 {strides = array<i32>} : memref<2x128xf32, #tpu.memory_space<vmem>>, vector<2x128xf32>,
    } else {
    }
    return
  }
  func.func @transform_0(%arg0: i32, %arg1: i32) -> (i32, i32, i32) {
    %c0_i32 = arith.constant 0 : i32
    %c0_i32_0 = arith.constant 0 : i32
    return %arg0, %c0_i32, %arg1 : i32, i32, i32
  }
  func.func @transform_1(%arg0: i32, %arg1: i32) -> (i32, i32) {
    %c0_i32 = arith.constant 0 : i32
    %c0_i32_0 = arith.constant 0 : i32
    %c0_i32_1 = arith.constant 0 : i32
    return %c0_i32, %c0_i32_0 : i32, i32
  }
  func.func @transform_2(%arg0: i32, %arg1: i32) -> (i32, i32) {
    %c0_i32 = arith.constant 0 : i32
    %c0_i32_0 = arith.constant 0 : i32
    %c0_i32_1 = arith.constant 0 : i32
    return %c0_i32, %c0_i32_0 : i32, i32
  }
  func.func @transform_3(%arg0: i32, %arg1: i32) -> (i32, i32) {
    %c0_i32 = arith.constant 0 : i32
    %c0_i32_0 = arith.constant 0 : i32
    return %arg0, %c0_i32 : i32, i32
  }
}

</mosaic_0001>

<llo_original>
// kernel: tpu_custom_call.1
$region0: #{tpu_custom_call.1}
  #allocation0 [shape = 'u32[]', space=smem, size = 0x4, offset = 0x4, fixed_abs, tag = 'smem constant byte address 0x4 - core index']
  #allocation1 [shape = 'u32[144,128]{1,0:T(1,128)}', space=vmem, size = 0x12000, scoped, tag = 'internal scratch']
  #allocation2 [shape = 'f32[2,4,128]{2,1,0:T(4,128)}', space=vmem, size = 0x1000, scoped, tag = 'scratch operand']
  %s0 = inlined_call_operand.hbm [shape: f32[2,4,256], index: 0, kind: input, shape index: {}]
  %s1 = inlined_call_operand.hbm [shape: f32[4,128], index: 1, kind: input, shape index: {}]
  %s2 = inlined_call_operand.vmem [shape: f32[1,128], index: 2, kind: input, shape index: {}]
  %s3 = inlined_call_operand.hbm [shape: f32[2,128], index: 3, kind: output, shape index: {}]
  %s4 = sld [smem:[#allocation0]]
  $region61: #{tpu_custom_call.1} parent=0
    _
  %s6 = ssub.s32 1, %s4
  %s7 = scalar_select 0, %s6, %s4
  $region1: #{tpu_custom_call.1} parent=0
    #allocation3 [shape = 'u8[8192]{0}', space=vmem, size = 0x2000, scoped, tag = 'input window, operand 0']
    #allocation4 [shape = 's32[2]{0}', space=sflag, size = 0x8, scoped, tag = 'scoped memory for tpu_custom_call.1']
    #allocation5 [shape = 's32[2]{0}', space=sflag, size = 0x8, scoped, tag = 'scoped memory for tpu_custom_call.1']
    #allocation6 [shape = 'u8[2048]{0}', space=vmem, size = 0x800, scoped, tag = 'input window, operand 1, single buffered']
    #allocation7 [shape = 's32[1]{0}', space=sflag, size = 0x4, scoped, tag = 'scoped memory for tpu_custom_call.1']
    #allocation8 [shape = 'u8[1024]{0}', space=vmem, size = 0x400, scoped, tag = 'output window, operand 0, single buffered']
    %8 = vsyncpa [#allocation4], 0
    %s9 = scalar_lea.sflag [#allocation4], 1
    %10 = vsyncpa %s9, 0
    %11 = vsyncpa [#allocation7], 0
    %12 = vsyncpa [#allocation5], 0
    loop: start=0, step=1, limit=4
    $region2: #{tpu_custom_call.1} parent=1 // loop_pre_header
      _
    $region3: #{tpu_custom_call.1} parent=1 // loop_header
      %s14 = sphi 0, %s18
      %p15 = scmp.ge.s32.totalorder %s14, 4
      %s21 = sphi 0, %s33
      %s22 = sphi 0, %s29
      %s23 = sphi 0, %s21
      %s24 = sphi 0, %s22
      %s25 = sphi 0, %s23
      %s26 = sphi 0, %s24
      %s38 = sphi 0, %s40
      %s41 = sphi 0, %s38
      %s42 = sphi 0, %s41
      %s58 = sphi 0, %s42
      %s62 = sphi 0, %s62
      %s64 = sphi 0, %s62
      %s65 = sphi 0, %s64
      %s79 = sphi 0, %s65
      %s83 = sphi 0, %s83
      %s85 = sphi 0, %s83
      %s86 = sphi 0, %s85
      %s100 = sphi 0, %s86
      %s106 = sphi 0, %s108
      %s109 = sphi 0, %s106
      %s110 = sphi 0, %s109
      %s126 = sphi 0, %s110
    $region4: #{tpu_custom_call.1} parent=1 // loop_header_branch
      %17 = sbr.rel (%p15) target = $region8
    $region5: #{tpu_custom_call.1} parent=1 // loop_body
      %s19 = ssub.s32 %s14, 1
      %s20 = ssub.s32 %s14, 2
      %s27 = sadd.s32 1, %s22
      %p28 = scmp.ge.s32.totalorder %s27, 2
      %s29 = scalar_select %p28, 0, %s27
      %s30 = sadd.s32 1, %s21
      %s31 = scalar_select %p28, %s30, %s21
      %p32 = scmp.ge.s32.totalorder %s31, 1
      %s33 = scalar_select %p32, 0, %s31
      %s34 = ssub.s32 %s21, %s33
      %s35 = ssub.s32 %s22, %s29
      %s36 = sor.u32 %s34, %s35
      %p37 = scmp.eq.s32.totalorder %s36, 0
      %s39 = sadd.s32 %s38, 1
      %s40 = scalar_select %p37, %s38, %s39
      %p43 = pneg %p37
      %p44 = scmp.eq.s32.totalorder %s14, 1
      %p45 = por %p43, %p44
      %p46 = scmp.ne.s32.totalorder %s38, %s41
      %p47 = scmp.eq.s32.totalorder %s14, 0
      %p48 = por %p46, %p47
      %p49 = scmp.ne.s32.totalorder %s38, %s41
      %p50 = scmp.eq.s32.totalorder %s19, 1
      %p51 = por %p49, %p50
      %p52 = scmp.ne.s32.totalorder %s41, %s42
      %p53 = scmp.eq.s32.totalorder %s19, 0
      %p54 = por %p52, %p53
      %p55 = scmp.ne.s32.totalorder %s41, %s42
      %p56 = scmp.eq.s32.totalorder %s20, 1
      %p57 = por %p55, %p56
      %p59 = scmp.ne.s32.totalorder %s42, %s58
      %p60 = scmp.eq.s32.totalorder %s20, 0
      %p61 = por %p59, %p60
      %s63 = sadd.s32 %s62, 1
      %p66 = scmp.eq.s32.totalorder %s14, 1
      %p67 = scmp.ne.s32.totalorder %s62, %s64
      %p68 = scmp.eq.s32.totalorder %s14, 0
      %p69 = por %p67, %p68
      %p70 = scmp.ne.s32.totalorder %s62, %s64
      %p71 = scmp.eq.s32.totalorder %s19, 1
      %p72 = por %p70, %p71
      %p73 = scmp.ne.s32.totalorder %s64, %s65
      %p74 = scmp.eq.s32.totalorder %s19, 0
      %p75 = por %p73, %p74
      %p76 = scmp.ne.s32.totalorder %s64, %s65
      %p77 = scmp.eq.s32.totalorder %s20, 1
      %p78 = por %p76, %p77
      %p80 = scmp.ne.s32.totalorder %s65, %s79
      %p81 = scmp.eq.s32.totalorder %s20, 0
      %p82 = por %p80, %p81
      %s84 = sadd.s32 %s83, 1
      %p87 = scmp.eq.s32.totalorder %s14, 1
      %p88 = scmp.ne.s32.totalorder %s83, %s85
      %p89 = scmp.eq.s32.totalorder %s14, 0
      %p90 = por %p88, %p89
      %p91 = scmp.ne.s32.totalorder %s83, %s85
      %p92 = scmp.eq.s32.totalorder %s19, 1
      %p93 = por %p91, %p92
      %p94 = scmp.ne.s32.totalorder %s85, %s86
      %p95 = scmp.eq.s32.totalorder %s19, 0
      %p96 = por %p94, %p95
      %p97 = scmp.ne.s32.totalorder %s85, %s86
      %p98 = scmp.eq.s32.totalorder %s20, 1
      %p99 = por %p97, %p98
      %p101 = scmp.ne.s32.totalorder %s86, %s100
      %p102 = scmp.eq.s32.totalorder %s20, 0
      %p103 = por %p101, %p102
      %s104 = ssub.s32 %s21, %s33
      %p105 = scmp.eq.s32.totalorder %s104, 0
      %s107 = sadd.s32 %s106, 1
      %s108 = scalar_select %p105, %s106, %s107
      %p111 = pneg %p105
      %p112 = scmp.eq.s32.totalorder %s14, 1
      %p113 = por %p111, %p112
      %p114 = scmp.ne.s32.totalorder %s106, %s109
      %p115 = scmp.eq.s32.totalorder %s14, 0
      %p116 = por %p114, %p115
      %p117 = scmp.ne.s32.totalorder %s106, %s109
      %p118 = scmp.eq.s32.totalorder %s19, 1
      %p119 = por %p117, %p118
      %p120 = scmp.ne.s32.totalorder %s109, %s110
      %p121 = scmp.eq.s32.totalorder %s19, 0
      %p122 = por %p120, %p121
      %p123 = scmp.ne.s32.totalorder %s109, %s110
      %p124 = scmp.eq.s32.totalorder %s20, 1
      %p125 = por %p123, %p124
      %p127 = scmp.ne.s32.totalorder %s110, %s126
      %p128 = scmp.eq.s32.totalorder %s20, 0
      %p129 = por %p127, %p128
      %p130 = scmp.le.s32.totalorder 1, %s14
      %p131 = scmp.lt.s32.totalorder %s14, 3
      %p132 = pnand %p130, %p131
      %p133 = pneg %p132
      // Predicated region
      $region9: #{tpu_custom_call.1} parent=5 // pred_check
        _
      $region10: #{tpu_custom_call.1} parent=5 // pred_check_branch
        %135 = sbr.rel (%p132) target = $region12
      $region11: #{tpu_custom_call.1} parent=5 // pred_region
        %s136 = ssub.s32 %s14, 1
        // Predicated region
        $region13: #{tpu_custom_call.1} parent=11 // pred_check
          %p137 = pneg %p75
        $region14: #{tpu_custom_call.1} parent=11 // pred_check_branch
          %139 = sbr.rel (%p137) target = $region16
        $region15: #{tpu_custom_call.1} parent=11 // pred_region
          %s141 = ssub.s32 64, 64
          %142 = vsyncadd [#allocation7], %s141
          %s144 = sshll.u32 [#allocation6], 4
          %s145 = int_to_ptr.vmem [resolvable:$true] %s144
          %147 = dma.hbm_to_vmem [thread:$0]  %s1, 64, %s145, [#allocation7]
        $region16: #{tpu_custom_call.1} parent=11 // pred_fallthru
          _
        // Predicated region
        $region17: #{tpu_custom_call.1} parent=11 // pred_check
          %p148 = pneg %p96
        $region18: #{tpu_custom_call.1} parent=11 // pred_check_branch
          %150 = sbr.rel (%p148) target = $region20
        $region19: #{tpu_custom_call.1} parent=11 // pred_region
          _
        $region20: #{tpu_custom_call.1} parent=11 // pred_fallthru
          _
      $region12: #{tpu_custom_call.1} parent=5 // pred_fallthru
        _
      %p151 = scmp.lt.s32.totalorder %s14, 2
      // Predicated region
      $region21: #{tpu_custom_call.1} parent=5 // pred_check
        %p152 = pneg %p151
      $region22: #{tpu_custom_call.1} parent=5 // pred_check_branch
        %154 = sbr.rel (%p152) target = $region24
      $region23: #{tpu_custom_call.1} parent=5 // pred_region
        // Predicated region
        $region25: #{tpu_custom_call.1} parent=23 // pred_check
          %p155 = pneg %p48
        $region26: #{tpu_custom_call.1} parent=23 // pred_check_branch
          %157 = sbr.rel (%p155) target = $region28
        $region27: #{tpu_custom_call.1} parent=23 // pred_region
          %s158 = sand.u32 %s38, 1
          %s159 = scalar_lea.sflag [#allocation4], %s158
          %s160 = sand.u32 %s38, 1
          %s161 = smul.addr %s160, 8
          %s162 = scalar_lea.vmem [#allocation3], %s161
          %s163 = smul.u32 2, %s21
          %s165 = ssub.s32 128, 128
          %166 = vsyncadd %s159, %s165
          %s167 = smul.addr %s163, 2
          %s168 = sadd.s32 %s22, %s167
          %s169 = smul.addr %s168, 64
          %s170 = scalar_lea.hbm %s0, %s169
          %s171 = sshll.u32 %s162, 4
          %s172 = int_to_ptr.vmem [resolvable:$true] %s171
          %177 = dma.hbm_to_vmem [thread:$0]  %s170, 128, %s172, %s159, 128, 64, 4
        $region28: #{tpu_custom_call.1} parent=23 // pred_fallthru
          _
      $region24: #{tpu_custom_call.1} parent=5 // pred_fallthru
        _
      %p178 = scmp.le.s32.totalorder 1, %s14
      %p179 = scmp.lt.s32.totalorder %s14, 3
      %p180 = pnand %p178, %p179
      %p181 = pneg %p180
      // Predicated region
      $region29: #{tpu_custom_call.1} parent=5 // pred_check
        _
      $region30: #{tpu_custom_call.1} parent=5 // pred_check_branch
        %183 = sbr.rel (%p180) target = $region32
      $region31: #{tpu_custom_call.1} parent=5 // pred_region
        %s184 = ssub.s32 %s14, 1
        %s185 = sand.u32 %s41, 1
        %s186 = scalar_lea.sflag [#allocation4], %s185
        %s187 = sand.u32 %s41, 1
        %s188 = smul.addr %s187, 8
        %s189 = scalar_lea.vmem [#allocation3], %s188
        // Predicated region
        $region33: #{tpu_custom_call.1} parent=31 // pred_check
          %p190 = pneg %p54
        $region34: #{tpu_custom_call.1} parent=31 // pred_check_branch
          %192 = sbr.rel (%p190) target = $region36
        $region35: #{tpu_custom_call.1} parent=31 // pred_region
          %193 = dma.done %s186, 128
        $region36: #{tpu_custom_call.1} parent=31 // pred_fallthru
          _
        // Predicated region
        $region37: #{tpu_custom_call.1} parent=31 // pred_check
          %p194 = pneg %p75
        $region38: #{tpu_custom_call.1} parent=31 // pred_check_branch
          %196 = sbr.rel (%p194) target = $region40
        $region39: #{tpu_custom_call.1} parent=31 // pred_region
          %197 = dma.done [#allocation7], 64
        $region40: #{tpu_custom_call.1} parent=31 // pred_fallthru
          _
        %s198 = sand.u32 %s41, 1
        %s199 = scalar_lea.sflag [#allocation4], %s198
        %s200 = sand.u32 %s41, 1
        %s201 = smul.addr %s200, 8
        %s202 = scalar_lea.vmem [#allocation3], %s201
        %p203 = pneg %p54
        %p204 = pneg %p51
        %p205 = pneg %p75
        %p206 = pneg %p72
        %p207 = pneg %p96
        %p208 = pneg %p93
        %p209 = pneg %p122
        %p210 = pneg %p119
        %s211 = smul.u32 2, %s23
        %p212 = scmp.eq.s32.totalorder %s24, 0
        // Predicated region
        $region41: #{tpu_custom_call.1} parent=31 // pred_check
          %p213 = pneg %p212
        $region42: #{tpu_custom_call.1} parent=31 // pred_check_branch
          %215 = sbr.rel (%p213) target = $region44
        $region43: #{tpu_custom_call.1} parent=31 // pred_region
          %216 = vst [vmem:[#allocation2] sm:$0xf] 0.0
          %217 = vst [vmem:[#allocation2 + $0x4] sm:$0xf] 0.0
        $region44: #{tpu_custom_call.1} parent=31 // pred_fallthru
          _
        %v218 = vld [vmem:[%s189] sm:$0xf]
        %v219 = vld [vmem:[%s189 + $0x4] sm:$0xf]
        %v220 = vld [vmem:[#allocation2] sm:$0xf]
        %v221 = vld [vmem:[#allocation2 + $0x4] sm:$0xf]
        %v222 = vadd.f32 %v220, %v218
        %v223 = vadd.f32 %v221, %v219
        %224 = vst [vmem:[#allocation2] sm:$0xf] %v222
        %225 = vst [vmem:[#allocation2 + $0x4] sm:$0xf] %v223
        %p226 = scmp.eq.s32.totalorder %s24, 1
        // Predicated region
        $region45: #{tpu_custom_call.1} parent=31 // pred_check
          %p227 = pneg %p226
        $region46: #{tpu_custom_call.1} parent=31 // pred_check_branch
          %229 = sbr.rel (%p227) target = $region48
        $region47: #{tpu_custom_call.1} parent=31 // pred_region
          %v230 = vld [vmem:[#allocation2] sm:$0xf]
          %v231 = vld [vmem:[#allocation2 + $0x4] sm:$0xf]
          %vm232 = vcmask 1043456
          %v233 = vsel %vm232, %v230, 0.0
          %234 = vadd.xlane.f32.xlu0 %v233
          %v235 = vpop.xlane.xlu0 %234
          %v236 = vsel %vm232, %v231, 0.0
          %237 = vadd.xlane.f32.xlu0 %v236
          %v238 = vpop.xlane.xlu0 %237
          %v239 = vld [vmem:[#allocation6] sm:$0xf]
          %v240 = vld [vmem:[%s2] sm:$0x1]
          %v242 = vlaneseq
          %v243 = vshrl.u32 %v242, 7
          %v244 = vsub.s32 0, %v243
          %v245 = vrot.slane %v240, %v244
          %v249 = vlaneseq
          %v250 = vand.u32 %v249, 127
          %v251 = vlaneseq
          %v252 = vshrl.u32 %v251, 7
          %v253 = vsub.s32 %v250, %v252
          %v254 = vrot.slane %v235, %v253
          %v255 = vlaneseq
          %v256 = vshrl.u32 %v255, 7
          %v257 = vsub.s32 %v250, %v256
          %v258 = vrot.slane %v238, %v257
          %vm259 = vcmask 1041409
          %v260 = vsel %vm259, %v258, %v254
          %vm261 = vcmask 31744
          %v262 = vsel %vm261, %v260, 0
          %v265 = vsel %vm232, %v239, 0
          %267 = vmatprep.subr.mxu0 0.0
          %268 = vmatpush1.msra.mxu0 %v265
          %269 = vmatprep.subr.mxu0 0.0
          %270 = vmatpush1.msra.mxu0 0.0
          %271 = vmatprep.subr.mxu0 0.0
          %272 = vmatpush1.msra.mxu0 0.0
          %273 = vmatprep.subr.mxu0 0.0
          %274 = vmatpush1.msra.mxu0 0.0
          %275 = vmatprep.subr.mxu0 0.0
          %276 = vmatpush1.msra.mxu0 0.0
          %277 = vmatprep.subr.mxu0 0.0
          %278 = vmatpush1.msra.mxu0 0.0
          %279 = vmatprep.subr.mxu0 0.0
          %280 = vmatpush1.msra.mxu0 0.0
          %281 = vmatprep.subr.mxu0 0.0
          %282 = vmatpush1.msra.mxu0 0.0
          %283 = vmatprep.subr.mxu0 0.0
          %284 = vmatpush1.msra.mxu0 0.0
          %285 = vmatprep.subr.mxu0 0.0
          %286 = vmatpush1.msra.mxu0 0.0
          %287 = vmatprep.subr.mxu0 0.0
          %288 = vmatpush1.msra.mxu0 0.0
          %289 = vmatprep.subr.mxu0 0.0
          %290 = vmatpush1.msra.mxu0 0.0
          %291 = vmatprep.subr.mxu0 0.0
          %292 = vmatpush1.msra.mxu0 0.0
          %293 = vmatprep.subr.mxu0 0.0
          %294 = vmatpush1.msra.mxu0 0.0
          %295 = vmatprep.subr.mxu0 0.0
          %296 = vmatpush1.msra.mxu0 0.0
          %297 = vmatprep.subr.mxu0 0.0
          %298 = vmatpush1.msra.mxu0 0.0
          %299 = vmatprep.subr.mxu0 0.0
          %300 = vmatpush1.msra.mxu0 0.0
          %301 = vmatprep.subr.mxu0 0.0
          %302 = vmatpush1.msra.mxu0 0.0
          %303 = vmatprep.subr.mxu0 0.0
          %304 = vmatpush1.msra.mxu0 0.0
          %305 = vmatprep.subr.mxu0 0.0
          %306 = vmatpush1.msra.mxu0 0.0
          %307 = vmatprep.subr.mxu0 0.0
          %308 = vmatpush1.msra.mxu0 0.0
          %309 = vmatprep.subr.mxu0 0.0
          %310 = vmatpush1.msra.mxu0 0.0
          %311 = vmatprep.subr.mxu0 0.0
          %312 = vmatpush1.msra.mxu0 0.0
          %313 = vmatprep.subr.mxu0 0.0
          %314 = vmatpush1.msra.mxu0 0.0
          %315 = vmatprep.subr.mxu0 0.0
          %316 = vmatpush1.msra.mxu0 0.0
          %317 = vmatprep.subr.mxu0 0.0
          %318 = vmatpush1.msra.mxu0 0.0
          %319 = vmatprep.subr.mxu0 0.0
          %320 = vmatpush1.msra.mxu0 0.0
          %321 = vmatprep.subr.mxu0 0.0
          %322 = vmatpush1.msra.mxu0 0.0
          %323 = vmatprep.subr.mxu0 0.0
          %324 = vmatpush1.msra.mxu0 0.0
          %325 = vmatprep.subr.mxu0 0.0
          %326 = vmatpush1.msra.mxu0 0.0
          %327 = vmatprep.subr.mxu0 0.0
          %328 = vmatpush1.msra.mxu0 0.0
          %329 = vmatprep.subr.mxu0 0.0
          %330 = vmatpush1.msra.mxu0 0.0
          %331 = vmatprep.mubr.f32.mxu0 0.0
          %332 = vmatmul.mubr.f32.gmra.mrb[0].mxu0 %v262
          %v333 = vpop.f32.mrb[0].mxu0
          %v334 = vadd.f32 %v245, %v333
          %v335 = vpop.f32.mrb[0].mxu0
          %336 = vdwg.mxu0
          %vm337 = vcmask 1041408
          %v338 = vsel %vm337, %v334, -inf
          %339 = vmax.xlane.f32.xlu0 %v338
          %v340 = vpop.xlane.xlu0 %339
          %v341 = vsub.f32 %v334, %v340
          %v342 = vmul.f32 %v341, 1.442695
          %v343 = vpow.pop %v342
          %v344 = vsel %vm337, %v343, 0.0
          %345 = vadd.xlane.f32.xlu0 %v344
          %v346 = vpop.xlane.xlu0 %345
          %v347 = vrcp.pop %v346
          %v348 = vmul.f32 %v343, %v347
          %349 = vst [vmem:[#allocation8] sm:$0x3] %v348
        $region48: #{tpu_custom_call.1} parent=31 // pred_fallthru
          _
        // Predicated region
        $region49: #{tpu_custom_call.1} parent=31 // pred_check
          %p350 = pneg %p119
        $region50: #{tpu_custom_call.1} parent=31 // pred_check_branch
          %352 = sbr.rel (%p350) target = $region52
        $region51: #{tpu_custom_call.1} parent=31 // pred_region
          %s354 = ssub.s32 32, 32
          %355 = vsyncadd [#allocation5], %s354
          %s356 = smul.addr %s23, 32
          %s357 = scalar_lea.hbm %s3, %s356
          %s359 = sshll.u32 [#allocation8], 4
          %s360 = int_to_ptr.vmem [resolvable:$true] %s359
          %362 = dma.vmem_to_hbm [thread:$0]  %s360, 32, %s357, [#allocation5]
        $region52: #{tpu_custom_call.1} parent=31 // pred_fallthru
          _
        // Predicated region
        $region53: #{tpu_custom_call.1} parent=31 // pred_check
          %p363 = pneg %p119
        $region54: #{tpu_custom_call.1} parent=31 // pred_check_branch
          %365 = sbr.rel (%p363) target = $region56
        $region55: #{tpu_custom_call.1} parent=31 // pred_region
          %366 = dma.done [#allocation5], 32
        $region56: #{tpu_custom_call.1} parent=31 // pred_fallthru
          _
      $region32: #{tpu_custom_call.1} parent=5 // pred_fallthru
        _
      %p367 = scmp.le.s32.totalorder 2, %s14
      // Predicated region
      $region57: #{tpu_custom_call.1} parent=5 // pred_check
        %p368 = pneg %p367
      $region58: #{tpu_custom_call.1} parent=5 // pred_check_branch
        %370 = sbr.rel (%p368) target = $region60
      $region59: #{tpu_custom_call.1} parent=5 // pred_region
        %s371 = ssub.s32 %s14, 2
      $region60: #{tpu_custom_call.1} parent=5 // pred_fallthru
        _
    $region6: #{tpu_custom_call.1} parent=1 // loop_footer
      %s18 = sadd.s32 1, %s14
    $region7: #{tpu_custom_call.1} parent=1 // loop_footer_branch
      %13 = sbr.rel target = $region3
    $region8: #{tpu_custom_call.1} parent=1 // loop_exit
      _
    %372 = vsyncpa [#allocation4], 1
    %s373 = scalar_lea.sflag [#allocation4], 1
    %374 = vsyncpa %s373, 1
    %375 = vsyncpa [#allocation7], 1
    %376 = vsyncpa [#allocation5], 1
    %s377 = scalar_lea.sflag [#allocation5], 1
    %378 = vsyncpa %s377, 1

</llo_original>
